<compile_context>
chip_gen: v7x
topology: tpu7x:2x2x1
jax: 0.10.0
libtpu: 0.0.40
codegen_flags: <defaults>
</compile_context>

<pallas_src>
import functools

import jax
import jax.numpy as jnp
from jax.experimental import pallas as pl
from jax.experimental.pallas import tpu as pltpu


_BN_EPS = 1e-5
_VMEM_LIMIT_BYTES = 32 * 1024 * 1024  # safe vs. v5e/v6e/v7x scoped budgets & v7x 64 MiB physical


def _round_up(v, m):
    return ((v + m - 1) // m) * m


def _stats_kernel(x_ref, w1_ref, b1_ref, sum_ref, sq_ref, *,
                  n_valid_rows, tile_rows, mask_rows):
    """Phase 1: h = relu(x @ W1 + b1); per-feature sum / sum-of-squares for this row tile."""
    h = jnp.dot(x_ref[...], w1_ref[...], preferred_element_type=jnp.float32) + b1_ref[...]
    h = jnp.maximum(h, 0.0)
    if mask_rows:
        # Zero-padded rows of the last (partial) tile still give relu(b1) != 0,
        # so they must be masked out of the BatchNorm statistics.
        row0 = pl.program_id(0) * tile_rows
        row_ids = row0 + jax.lax.broadcasted_iota(jnp.int32, h.shape, 0)
        h = jnp.where(row_ids < n_valid_rows, h, 0.0)
    sum_ref[0] = jnp.sum(h, axis=0, keepdims=True)      # (1, Hp), f32
    sq_ref[0] = jnp.sum(h * h, axis=0, keepdims=True)   # (1, Hp), f32


def _logits_kernel(x_ref, w1_ref, b1_ref, a2_ref, b2_ref, o_ref):
    """Phase 2: recompute h, apply folded BN + dis2 (h @ w2_eff + b2_eff), sigmoid, lane-dense store."""
    h = jnp.dot(x_ref[...], w1_ref[...], preferred_element_type=jnp.float32) + b1_ref[...]
    h = jnp.maximum(h, 0.0)
    # (8, Hp) x (TN, Hp)^T -> (8, TN): trans-B matmul (same dimension numbers as the
    # Pallas flash-attention kernel) puts the per-row logits along the lane axis in
    # row 0 (rows 1..7 of a2 are zero padding), so the store below is lane-dense.
    logits = jax.lax.dot_general(
        a2_ref[...], h, (((1,), (1,)), ((), ())),
        preferred_element_type=jnp.float32)
    o_ref[0] = jax.nn.sigmoid(logits[0:1, :] + b2_ref[0, 0])


def discriminator_forward(x, params, *, tile_rows=512, use_bf16=False):
    """x: (B, T, input_dim) -> (B, T, 1), matching Discriminator.forward (BN in training mode)."""
    B, T, D = x.shape
    H = params["w1"].shape[1]
    N = B * T

    # ---- pad hidden dim to a lane-dense multiple of 128 (zero-padded weights) ----
    Hp = _round_up(max(H, 128), 128)
    w1 = jnp.pad(params["w1"].astype(jnp.float32), ((0, 0), (0, Hp - H)))
    b1 = jnp.pad(params["b1"].astype(jnp.float32), ((0, 0), (0, Hp - H)))
    gamma = jnp.pad(params["gamma"].astype(jnp.float32), ((0, 0), (0, Hp - H)))
    beta = jnp.pad(params["beta"].astype(jnp.float32), ((0, 0), (0, Hp - H)))
    w2 = jnp.pad(params["w2"].astype(jnp.float32), ((0, Hp - H), (0, 0)))

    # ---- tile the N = B*T rows; pad to a whole number of tiles ----
    tn = min(tile_rows, _round_up(N, 8))
    num_tiles = pl.cdiv(N, tn)
    Np = num_tiles * tn
    x2d = jnp.pad(x.reshape(N, D).astype(jnp.float32), ((0, Np - N), (0, 0)))

    if use_bf16:
        # Halves the dominant HBM traffic (x is read twice); dots still accumulate in f32.
        x2d = x2d.astype(jnp.bfloat16)
        w1 = w1.astype(jnp.bfloat16)
    x_itemsize = x2d.dtype.itemsize
    w_itemsize = w1.dtype.itemsize

    cparams = pltpu.CompilerParams(
        dimension_semantics=("parallel",),          # both passes are per-tile independent
        vmem_limit_bytes=_VMEM_LIMIT_BYTES,
    )
    x_spec = pl.BlockSpec((tn, D), lambda i: (i, 0))
    w1_spec = pl.BlockSpec((D, Hp), lambda i: (0, 0))
    b1_spec = pl.BlockSpec((1, Hp), lambda i: (0, 0))

    # ---------------- phase 1: per-tile partial BN statistics ----------------
    stats_cost = pl.CostEstimate(
        flops=2 * Np * D * Hp + 6 * Np * Hp,
        transcendentals=0,
        bytes_accessed=Np * D * x_itemsize + D * Hp * w_itemsize
        + Hp * 4 + 2 * num_tiles * Hp * 4,
    )
    part_sums, part_sqs = pl.pallas_call(
        functools.partial(_stats_kernel, n_valid_rows=N, tile_rows=tn,
                          mask_rows=(Np != N)),
        grid=(num_tiles,),
        in_specs=[x_spec, w1_spec, b1_spec],
        out_specs=(
            pl.BlockSpec((1, 1, Hp), lambda i: (i, 0, 0)),
            pl.BlockSpec((1, 1, Hp), lambda i: (i, 0, 0)),
        ),
        out_shape=(
            jax.ShapeDtypeStruct((num_tiles, 1, Hp), jnp.float32),
            jax.ShapeDtypeStruct((num_tiles, 1, Hp), jnp.float32),
        ),
        compiler_params=cparams,
        cost_estimate=stats_cost,
    )(x2d, w1, b1)

    # ---- tiny per-feature glue: BN stats + fold BN affine and dis2 into (w2_eff, b2_eff) ----
    total = jnp.sum(part_sums, axis=(0, 1))                      # (Hp,) f32
    total_sq = jnp.sum(part_sqs, axis=(0, 1))                    # (Hp,) f32
    mean = total / N                                             # true N, not padded Np
    var = jnp.maximum(total_sq / N - mean * mean, 0.0)           # biased var (training-mode BN)
    inv_std = jax.lax.rsqrt(var + _BN_EPS)
    scale = inv_std * gamma[0]                                   # (Hp,)
    shift = beta[0] - mean * scale                               # (Hp,)
    w2_row = w2[:, 0]                                            # (Hp,) — zero on padded features
    w2_eff = scale * w2_row
    b2_eff = jnp.sum(shift * w2_row) + params["b2"].reshape(())
    a2 = jnp.zeros((8, Hp), jnp.float32).at[0, :].set(w2_eff)    # 8-row LHS for the trans-B matmul
    b2s = jnp.reshape(b2_eff, (1, 1)).astype(jnp.float32)        # scalar via SMEM

    # ---------------- phase 2: normalize + project + sigmoid, lane-dense output ----------------
    out_cost = pl.CostEstimate(
        flops=2 * Np * D * Hp + 2 * Np * Hp * 8 + 4 * Np,
        transcendentals=Np,
        bytes_accessed=Np * D * x_itemsize + D * Hp * w_itemsize
        + 9 * Hp * 4 + Np * 4 + 4,
    )
    out = pl.pallas_call(
        _logits_kernel,
        grid=(num_tiles,),
        in_specs=[
            x_spec,
            w1_spec,
            b1_spec,
            pl.BlockSpec((8, Hp), lambda i: (0, 0)),
            pl.BlockSpec(memory_space=pltpu.MemorySpace.SMEM),
        ],
        out_specs=pl.BlockSpec((1, 1, tn), lambda i: (i, 0, 0)),
        out_shape=jax.ShapeDtypeStruct((num_tiles, 1, tn), jnp.float32),
        compiler_params=cparams,
        cost_estimate=out_cost,
    )(x2d, w1, b1, a2, b2s)

    return out.reshape(Np)[:N].reshape(B, T, 1)


def init_params(key, input_dim, hidden_dim):
    k1, k2, k3, k4 = jax.random.split(key, 4)
    # Deterministic synthetic init (PyTorch-Linear-style uniform ranges).
    bound1 = 1.0 / (input_dim ** 0.5)
    bound2 = 1.0 / (hidden_dim ** 0.5)
    return {
        "w1": jax.random.uniform(k1, (input_dim, hidden_dim), jnp.float32, -bound1, bound1),
        "b1": jax.random.uniform(k2, (1, hidden_dim), jnp.float32, -bound1, bound1),
        # BatchNorm1d default affine init: gamma=1, beta=0
        "gamma": jnp.ones((1, hidden_dim), jnp.float32),
        "beta": jnp.zeros((1, hidden_dim), jnp.float32),
        "w2": jax.random.uniform(k3, (hidden_dim, 1), jnp.float32, -bound2, bound2),
        "b2": jax.random.uniform(k4, (1, 1), jnp.float32, -bound2, bound2),
    }


def _reference(x, p):
    # Pure-JAX reference (centered-variance BatchNorm), for sanity checking.
    B, T, D = x.shape
    h = jnp.maximum(x.reshape(B * T, D) @ p["w1"] + p["b1"], 0.0)
    mean = h.mean(axis=0, keepdims=True)
    var = ((h - mean) ** 2).mean(axis=0, keepdims=True)
    hn = (h - mean) / jnp.sqrt(var + _BN_EPS) * p["gamma"] + p["beta"]
    y = jax.nn.sigmoid(hn @ p["w2"] + p["b2"])
    return y.reshape(B, T, 1)


# TODO(synk): BatchNorm1d running_mean/running_var momentum updates (stateful buffers) are not
# emitted; only the training-mode forward normalization is computed, matching forward() output.

if __name__ == "__main__":
    key = jax.random.PRNGKey(0)
    kx, kp = jax.random.split(key)

    # Small shapes consistent with the module: (batch, seq, input_dim)
    B, T, input_dim, hidden_dim = 2, 8, 32, 32
    x = jax.random.normal(kx, (B, T, input_dim), jnp.float32)
    params = init_params(kp, input_dim, hidden_dim)

    y = jax.jit(discriminator_forward)(x, params)
    jax.block_until_ready(y)

    y_ref = _reference(x, params)
    assert y.shape == (B, T, 1)
    assert jnp.allclose(y, y_ref, atol=2e-5, rtol=2e-5), float(jnp.max(jnp.abs(y - y_ref)))

    print("KERNEL_OK")
</pallas_src>

<mosaic_0001>
module attributes {stable_mosaic.version = 11 : i64} {
  func.func @_stats_kernel(%arg0: i32, %arg1: memref<16x32xf32, #tpu.memory_space<vmem>>, %arg2: memref<32x128xf32, #tpu.memory_space<vmem>>, %arg3: memref<1x128xf32, #tpu.memory_space<vmem>>, %arg4: memref<1x1x128xf32, #tpu.memory_space<vmem>>, %arg5: memref<1x1x128xf32, #tpu.memory_space<vmem>>) attributes {dimension_semantics = [#tpu.dimension_semantics<parallel>], iteration_bounds = array<i64: 1>, scalar_prefetch = 0 : i64, scratch_operands = 0 : i64, tpu.core_type = #tpu.core_type<tc>, window_params = [{transform_indices = @transform_0, window_bounds = array<i64: 16, 32>}, {pipeline_mode = #tpu.pipeline_mode<synchronous>, transform_indices = @transform_1, window_bounds = array<i64: 32, 128>}, {pipeline_mode = #tpu.pipeline_mode<synchronous>, transform_indices = @transform_2, window_bounds = array<i64: 1, 128>}, {transform_indices = @transform_3, window_bounds = array<i64: 1, 1, 128>}, {transform_indices = @transform_4, window_bounds = array<i64: 1, 1, 128>}]} {
    %c0 = arith.constant 0 : index
    %c0_0 = arith.constant 0 : index
    %0 = vector.load %arg1[%c0, %c0_0] : memref<16x32xf32, #tpu.memory_space<vmem>>, vector<16x32xf32>
    %c0_1 = arith.constant 0 : index
    %c0_2 = arith.constant 0 : index
    %1 = vector.load %arg2[%c0_1, %c0_2] : memref<32x128xf32, #tpu.memory_space<vmem>>, vector<32x128xf32>
    %cst = arith.constant dense<0.000000e+00> : vector<16x128xf32>
    %2 = tpu.matmul %0, %1, %cst {dimension_numbers = #tpu.dot_dimension_numbers<[1], [0], [0], [1], [0, 0, 1, 1], [], []>} : vector<16x32xf32>, vector<32x128xf32>, vector<16x128xf32> -> vector<16x128xf32>
    %c0_3 = arith.constant 0 : index
    %c0_4 = arith.constant 0 : index
    %3 = vector.load %arg3[%c0_3, %c0_4] : memref<1x128xf32, #tpu.memory_space<vmem>>, vector<1x128xf32>
    %4 = vector.broadcast %3 : vector<1x128xf32> to vector<16x128xf32>
    %5 = arith.addf %2, %4 : vector<16x128xf32>
    %cst_5 = arith.constant 0.000000e+00 : f32
    %6 = vector.broadcast %cst_5 : f32 to vector<16x128xf32>
    %7 = arith.maximumf %5, %6 : vector<16x128xf32>
    %cst_6 = arith.constant dense<0.000000e+00> : vector<128xf32>
    %8 = vector.multi_reduction <add>, %7, %cst_6 [0] : vector<16x128xf32> to vector<128xf32>
    %9 = vector.shape_cast %8 : vector<128xf32> to vector<1x128xf32>
    %c0_7 = arith.constant 0 : index
    %c0_8 = arith.constant 0 : index
    %c0_9 = arith.constant 0 : index
    %10 = vector.load %arg4[%c0_7, %c0_8, %c0_9] : memref<1x1x128xf32, #tpu.memory_space<vmem>>, vector<1x1x128xf32>
    %11 = vector.shape_cast %10 : vector<1x1x128xf32> to vector<1x128xf32>
    %12 = vector.shape_cast %9 : vector<1x128xf32> to vector<1x1x128xf32>
    tpu.vector_store %arg4[%c0_7, %c0_8, %c0_9], %12 {strides = array<i32>} : memref<1x1x128xf32, #tpu.memory_space<vmem>>, vector<1x1x128xf32>,
    %13 = arith.mulf %7, %7 : vector<16x128xf32>
    %cst_10 = arith.constant dense<0.000000e+00> : vector<128xf32>
    %14 = vector.multi_reduction <add>, %13, %cst_10 [0] : vector<16x128xf32> to vector<128xf32>
    %15 = vector.shape_cast %14 : vector<128xf32> to vector<1x128xf32>
    %c0_11 = arith.constant 0 : index
    %c0_12 = arith.constant 0 : index
    %c0_13 = arith.constant 0 : index
    %16 = vector.load %arg5[%c0_11, %c0_12, %c0_13] : memref<1x1x128xf32, #tpu.memory_space<vmem>>, vector<1x1x128xf32>
    %17 = vector.shape_cast %16 : vector<1x1x128xf32> to vector<1x128xf32>
    %18 = vector.shape_cast %15 : vector<1x128xf32> to vector<1x1x128xf32>
    tpu.vector_store %arg5[%c0_11, %c0_12, %c0_13], %18 {strides = array<i32>} : memref<1x1x128xf32, #tpu.memory_space<vmem>>, vector<1x1x128xf32>,
    return
  }
  func.func @transform_0(%arg0: i32) -> (i32, i32) {
    %c0_i32 = arith.constant 0 : i32
    %c0_i32_0 = arith.constant 0 : i32
    return %arg0, %c0_i32 : i32, i32
  }
  func.func @transform_1(%arg0: i32) -> (i32, i32) {
    %c0_i32 = arith.constant 0 : i32
    %c0_i32_0 = arith.constant 0 : i32
    %c0_i32_1 = arith.constant 0 : i32
    return %c0_i32, %c0_i32_0 : i32, i32
  }
  func.func @transform_2(%arg0: i32) -> (i32, i32) {
    %c0_i32 = arith.constant 0 : i32
    %c0_i32_0 = arith.constant 0 : i32
    %c0_i32_1 = arith.constant 0 : i32
    return %c0_i32, %c0_i32_0 : i32, i32
  }
  func.func @transform_3(%arg0: i32) -> (i32, i32, i32) {
    %c0_i32 = arith.constant 0 : i32
    %c0_i32_0 = arith.constant 0 : i32
    %c0_i32_1 = arith.constant 0 : i32
    return %arg0, %c0_i32, %c0_i32_0 : i32, i32, i32
  }
  func.func @transform_4(%arg0: i32) -> (i32, i32, i32) {
    %c0_i32 = arith.constant 0 : i32
    %c0_i32_0 = arith.constant 0 : i32
    %c0_i32_1 = arith.constant 0 : i32
    return %arg0, %c0_i32, %c0_i32_0 : i32, i32, i32
  }
}

module attributes {stable_mosaic.version = 11 : i64} {
  func.func @_logits_kernel(%arg0: i32, %arg1: memref<16x32xf32, #tpu.memory_space<vmem>>, %arg2: memref<32x128xf32, #tpu.memory_space<vmem>>, %arg3: memref<1x128xf32, #tpu.memory_space<vmem>>, %arg4: memref<8x128xf32, #tpu.memory_space<vmem>>, %arg5: memref<1x1xf32, #tpu.memory_space<smem>>, %arg6: memref<1x1x16xf32, #tpu.memory_space<vmem>>) attributes {dimension_semantics = [#tpu.dimension_semantics<parallel>], iteration_bounds = array<i64: 1>, scalar_prefetch = 0 : i64, scratch_operands = 0 : i64, tpu.core_type = #tpu.core_type<tc>, window_params = [{transform_indices = @transform_0, window_bounds = array<i64: 16, 32>}, {pipeline_mode = #tpu.pipeline_mode<synchronous>, transform_indices = @transform_1, window_bounds = array<i64: 32, 128>}, {pipeline_mode = #tpu.pipeline_mode<synchronous>, transform_indices = @transform_2, window_bounds = array<i64: 1, 128>}, {pipeline_mode = #tpu.pipeline_mode<synchronous>, transform_indices = @transform_3, window_bounds = array<i64: 8, 128>}, {transform_indices = @transform_4, window_bounds = array<i64: 1, 1>}, {transform_indices = @transform_5, window_bounds = array<i64: 1, 1, 16>}]} {
    %c0 = arith.constant 0 : index
    %c0_0 = arith.constant 0 : index
    %0 = vector.load %arg1[%c0, %c0_0] : memref<16x32xf32, #tpu.memory_space<vmem>>, vector<16x32xf32>
    %c0_1 = arith.constant 0 : index
    %c0_2 = arith.constant 0 : index
    %1 = vector.load %arg2[%c0_1, %c0_2] : memref<32x128xf32, #tpu.memory_space<vmem>>, vector<32x128xf32>
    %cst = arith.constant dense<0.000000e+00> : vector<16x128xf32>
    %2 = tpu.matmul %0, %1, %cst {dimension_numbers = #tpu.dot_dimension_numbers<[1], [0], [0], [1], [0, 0, 1, 1], [], []>} : vector<16x32xf32>, vector<32x128xf32>, vector<16x128xf32> -> vector<16x128xf32>
    %c0_3 = arith.constant 0 : index
    %c0_4 = arith.constant 0 : index
    %3 = vector.load %arg3[%c0_3, %c0_4] : memref<1x128xf32, #tpu.memory_space<vmem>>, vector<1x128xf32>
    %4 = vector.broadcast %3 : vector<1x128xf32> to vector<16x128xf32>
    %5 = arith.addf %2, %4 : vector<16x128xf32>
    %cst_5 = arith.constant 0.000000e+00 : f32
    %6 = vector.broadcast %cst_5 : f32 to vector<16x128xf32>
    %7 = arith.maximumf %5, %6 : vector<16x128xf32>
    %c0_6 = arith.constant 0 : index
    %c0_7 = arith.constant 0 : index
    %8 = vector.load %arg4[%c0_6, %c0_7] : memref<8x128xf32, #tpu.memory_space<vmem>>, vector<8x128xf32>
    %cst_8 = arith.constant dense<0.000000e+00> : vector<8x16xf32>
    %9 = tpu.matmul %8, %7, %cst_8 {dimension_numbers = #tpu.dot_dimension_numbers<[1], [1], [0], [0], [0, 0, 1, 0], [], []>} : vector<8x128xf32>, vector<16x128xf32>, vector<8x16xf32> -> vector<8x16xf32>
    %10 = vector.extract_strided_slice %9 {offsets = [0, 0], sizes = [1, 16], strides = [1, 1]} : vector<8x16xf32> to vector<1x16xf32>
    %c0_9 = arith.constant 0 : index
    %c0_10 = arith.constant 0 : index
    %11 = memref.load %arg5[%c0_9, %c0_10] : memref<1x1xf32, #tpu.memory_space<smem>>
    %12 = vector.broadcast %11 : f32 to vector<1x16xf32>
    %13 = arith.addf %10, %12 : vector<1x16xf32>
    %14 = arith.negf %13 : vector<1x16xf32>
    %15 = math.exp %14 : vector<1x16xf32>
    %cst_11 = arith.constant 1.000000e+00 : f32
    %16 = vector.broadcast %cst_11 : f32 to vector<1x16xf32>
    %17 = arith.addf %16, %15 : vector<1x16xf32>
    %18 = arith.divf %16, %17 : vector<1x16xf32>
    %c0_12 = arith.constant 0 : index
    %c0_13 = arith.constant 0 : index
    %c0_14 = arith.constant 0 : index
    %19 = vector.load %arg6[%c0_12, %c0_13, %c0_14] : memref<1x1x16xf32, #tpu.memory_space<vmem>>, vector<1x1x16xf32>
    %20 = vector.shape_cast %19 : vector<1x1x16xf32> to vector<1x16xf32>
    %21 = vector.shape_cast %18 : vector<1x16xf32> to vector<1x1x16xf32>
    tpu.vector_store %arg6[%c0_12, %c0_13, %c0_14], %21 {strides = array<i32>} : memref<1x1x16xf32, #tpu.memory_space<vmem>>, vector<1x1x16xf32>,
    return
  }
  func.func @transform_0(%arg0: i32) -> (i32, i32) {
    %c0_i32 = arith.constant 0 : i32
    %c0_i32_0 = arith.constant 0 : i32
    return %arg0, %c0_i32 : i32, i32
  }
  func.func @transform_1(%arg0: i32) -> (i32, i32) {
    %c0_i32 = arith.constant 0 : i32
    %c0_i32_0 = arith.constant 0 : i32
    %c0_i32_1 = arith.constant 0 : i32
    return %c0_i32, %c0_i32_0 : i32, i32
  }
  func.func @transform_2(%arg0: i32) -> (i32, i32) {
    %c0_i32 = arith.constant 0 : i32
    %c0_i32_0 = arith.constant 0 : i32
    %c0_i32_1 = arith.constant 0 : i32
    return %c0_i32, %c0_i32_0 : i32, i32
  }
  func.func @transform_3(%arg0: i32) -> (i32, i32) {
    %c0_i32 = arith.constant 0 : i32
    %c0_i32_0 = arith.constant 0 : i32
    %c0_i32_1 = arith.constant 0 : i32
    return %c0_i32, %c0_i32_0 : i32, i32
  }
  func.func @transform_4(%arg0: i32) -> (i32, i32) {
    %c0_i32 = arith.constant 0 : i32
    %c0_i32_0 = arith.constant 0 : i32
    %c0_i32_1 = arith.constant 0 : i32
    return %c0_i32, %c0_i32_0 : i32, i32
  }
  func.func @transform_5(%arg0: i32) -> (i32, i32, i32) {
    %c0_i32 = arith.constant 0 : i32
    %c0_i32_0 = arith.constant 0 : i32
    %c0_i32_1 = arith.constant 0 : i32
    return %arg0, %c0_i32, %c0_i32_0 : i32, i32, i32
  }
}

</mosaic_0001>

<llo_original>
// kernel: discriminator_forward.2
$region0: #{discriminator_forward.2}
  #allocation0 [shape = 'u32[]', space=smem, size = 0x4, offset = 0x4, fixed_abs, tag = 'smem constant byte address 0x4 - core index']
  #allocation1 [shape = 'u32[144,128]{1,0:T(1,128)}', space=vmem, size = 0x12000, scoped, tag = 'internal scratch']
  %s0 = inlined_call_operand.vmem [shape: f32[16,32], index: 0, kind: input, shape index: {}]
  %s1 = inlined_call_operand.vmem [shape: f32[32,128], index: 1, kind: input, shape index: {}]
  %s2 = inlined_call_operand.vmem [shape: f32[1,128], index: 2, kind: input, shape index: {}]
  %s3 = inlined_call_operand.vmem [shape: f32[1,1,128], index: 3, kind: output, shape index: {0}]
  %s4 = inlined_call_operand.vmem [shape: f32[1,1,128], index: 4, kind: output, shape index: {1}]
  %5 = xla_tuple %s3, %s4
  %s6 = sld [smem:[#allocation0]]
  $region30: #{discriminator_forward.2} parent=0
    _
  %s8 = ssub.s32 1, %s6
  %s9 = scalar_select 0, %s8, %s6
  // Predicated region
  $region2: #{discriminator_forward.2} parent=0 // pred_check
    _
  $region3: #{discriminator_forward.2} parent=0 // pred_check_branch
    %11 = sbr.rel (0) target = $region5
  $region4: #{discriminator_forward.2} parent=0 // pred_region
    _
  $region5: #{discriminator_forward.2} parent=0 // pred_fallthru
    _
  // Predicated region
  $region6: #{discriminator_forward.2} parent=0 // pred_check
    _
  $region7: #{discriminator_forward.2} parent=0 // pred_check_branch
    %13 = sbr.rel (0) target = $region9
  $region8: #{discriminator_forward.2} parent=0 // pred_region
    _
  $region9: #{discriminator_forward.2} parent=0 // pred_fallthru
    _
  // Predicated region
  $region10: #{discriminator_forward.2} parent=0 // pred_check
    _
  $region11: #{discriminator_forward.2} parent=0 // pred_check_branch
    %15 = sbr.rel (0) target = $region13
  $region12: #{discriminator_forward.2} parent=0 // pred_region
    _
  $region13: #{discriminator_forward.2} parent=0 // pred_fallthru
    _
  %v16 = vld [vmem:[%s0] sm:$0xff]
  %v17 = vld [vmem:[%s0 + $0x8] sm:$0xff]
  %v18 = vld [vmem:[%s1] sm:$0xff]
  %v19 = vld [vmem:[%s1 + $0x8] sm:$0xff]
  %v20 = vld [vmem:[%s1 + $0x10] sm:$0xff]
  %v21 = vld [vmem:[%s1 + $0x18] sm:$0xff]
  %v22 = vld [vmem:[%s2] sm:$0x1]
  %v24 = vlaneseq
  %v25 = vshrl.u32 %v24, 7
  %v26 = vsub.s32 0, %v25
  %v27 = vrot.slane %v22, %v26
  %vm29 = vcmask 261120
  %v31 = vsel %vm29, %v16, 0
  %v34 = vsel %vm29, %v17, 0
  %36 = vmatprep.subr.mxu0 0.0
  %37 = vmatpush1.msra.mxu0 %v18
  %38 = vmatprep.subr.mxu0 0.0
  %39 = vmatpush1.msra.mxu0 %v19
  %40 = vmatprep.subr.mxu0 0.0
  %41 = vmatpush1.msra.mxu0 %v20
  %42 = vmatprep.subr.mxu0 0.0
  %43 = vmatpush1.msra.mxu0 %v21
  %44 = vmatprep.subr.mxu0 0.0
  %45 = vmatpush1.msra.mxu0 0.0
  %46 = vmatprep.subr.mxu0 0.0
  %47 = vmatpush1.msra.mxu0 0.0
  %48 = vmatprep.subr.mxu0 0.0
  %49 = vmatpush1.msra.mxu0 0.0
  %50 = vmatprep.subr.mxu0 0.0
  %51 = vmatpush1.msra.mxu0 0.0
  %52 = vmatprep.subr.mxu0 0.0
  %53 = vmatpush1.msra.mxu0 0.0
  %54 = vmatprep.subr.mxu0 0.0
  %55 = vmatpush1.msra.mxu0 0.0
  %56 = vmatprep.subr.mxu0 0.0
  %57 = vmatpush1.msra.mxu0 0.0
  %58 = vmatprep.subr.mxu0 0.0
  %59 = vmatpush1.msra.mxu0 0.0
  %60 = vmatprep.subr.mxu0 0.0
  %61 = vmatpush1.msra.mxu0 0.0
  %62 = vmatprep.subr.mxu0 0.0
  %63 = vmatpush1.msra.mxu0 0.0
  %64 = vmatprep.subr.mxu0 0.0
  %65 = vmatpush1.msra.mxu0 0.0
  %66 = vmatprep.subr.mxu0 0.0
  %67 = vmatpush1.msra.mxu0 0.0
  %68 = vmatprep.subr.mxu0 0.0
  %69 = vmatpush1.msra.mxu0 0.0
  %70 = vmatprep.subr.mxu0 0.0
  %71 = vmatpush1.msra.mxu0 0.0
  %72 = vmatprep.subr.mxu0 0.0
  %73 = vmatpush1.msra.mxu0 0.0
  %74 = vmatprep.subr.mxu0 0.0
  %75 = vmatpush1.msra.mxu0 0.0
  %76 = vmatprep.subr.mxu0 0.0
  %77 = vmatpush1.msra.mxu0 0.0
  %78 = vmatprep.subr.mxu0 0.0
  %79 = vmatpush1.msra.mxu0 0.0
  %80 = vmatprep.subr.mxu0 0.0
  %81 = vmatpush1.msra.mxu0 0.0
  %82 = vmatprep.subr.mxu0 0.0
  %83 = vmatpush1.msra.mxu0 0.0
  %84 = vmatprep.subr.mxu0 0.0
  %85 = vmatpush1.msra.mxu0 0.0
  %86 = vmatprep.subr.mxu0 0.0
  %87 = vmatpush1.msra.mxu0 0.0
  %88 = vmatprep.subr.mxu0 0.0
  %89 = vmatpush1.msra.mxu0 0.0
  %90 = vmatprep.subr.mxu0 0.0
  %91 = vmatpush1.msra.mxu0 0.0
  %92 = vmatprep.subr.mxu0 0.0
  %93 = vmatpush1.msra.mxu0 0.0
  %94 = vmatprep.subr.mxu0 0.0
  %95 = vmatpush1.msra.mxu0 0.0
  %96 = vmatprep.subr.mxu0 0.0
  %97 = vmatpush1.msra.mxu0 0.0
  %98 = vmatprep.subr.mxu0 0.0
  %99 = vmatpush1.msra.mxu0 0.0
  %100 = vmatprep.mubr.f32.mxu0 0.0
  %101 = vmatmul.mubr.f32.gmra.mrb[0].mxu0 %v31
  %v102 = vpop.f32.mrb[0].mxu0
  %v103 = vadd.f32 %v27, %v102
  %v104 = vpop.f32.mrb[0].mxu0
  %105 = vmatprep.mubr.f32.mxu0 0.0
  %106 = vmatmul.mubr.f32.gmra.mrb[0].mxu0 %v34
  %v107 = vpop.f32.mrb[0].mxu0
  %v108 = vadd.f32 %v27, %v107
  %v109 = vpop.f32.mrb[0].mxu0
  %110 = vdwg.mxu0
  %v111 = vmax.f32 %v103, 0.0
  %v112 = vmax.f32 %v108, 0.0
  %v113 = vadd.f32 %v111, %v112
  %v114 = vrot.slane %v113, 4
  %v115 = vadd.f32 %v113, %v114
  %v116 = vrot.slane %v115, 2
  %v117 = vadd.f32 %v115, %v116
  %v118 = vrot.slane %v117, 1
  %v119 = vadd.f32 %v117, %v118
  %120 = vst [vmem:[%s3] sm:$0x1] %v119
  %v121 = vmul.f32 %v111, %v111
  %v122 = vmul.f32 %v112, %v112
  %v123 = vadd.f32 %v121, %v122
  %v124 = vrot.slane %v123, 4
  %v125 = vadd.f32 %v123, %v124
  %v126 = vrot.slane %v125, 2
  %v127 = vadd.f32 %v125, %v126
  %v128 = vrot.slane %v127, 1
  %v129 = vadd.f32 %v127, %v128
  %130 = vst [vmem:[%s4] sm:$0x1] %v129
  // Predicated region
  $region14: #{discriminator_forward.2} parent=0 // pred_check
    _
  $region15: #{discriminator_forward.2} parent=0 // pred_check_branch
    %132 = sbr.rel (0) target = $region17
  $region16: #{discriminator_forward.2} parent=0 // pred_region
    _
  $region17: #{discriminator_forward.2} parent=0 // pred_fallthru
    _
  // Predicated region
  $region18: #{discriminator_forward.2} parent=0 // pred_check
    _
  $region19: #{discriminator_forward.2} parent=0 // pred_check_branch
    %134 = sbr.rel (0) target = $region21
  $region20: #{discriminator_forward.2} parent=0 // pred_region
    _
  $region21: #{discriminator_forward.2} parent=0 // pred_fallthru
    _
  // Predicated region
  $region22: #{discriminator_forward.2} parent=0 // pred_check
    _
  $region23: #{discriminator_forward.2} parent=0 // pred_check_branch
    %136 = sbr.rel (0) target = $region25
  $region24: #{discriminator_forward.2} parent=0 // pred_region
    _
  $region25: #{discriminator_forward.2} parent=0 // pred_fallthru
    _
  // Predicated region
  $region26: #{discriminator_forward.2} parent=0 // pred_check
    _
  $region27: #{discriminator_forward.2} parent=0 // pred_check_branch
    %138 = sbr.rel (0) target = $region29
  $region28: #{discriminator_forward.2} parent=0 // pred_region
    _
  $region29: #{discriminator_forward.2} parent=0 // pred_fallthru
    _

// kernel: discriminator_forward.3
$region0: #{discriminator_forward.3}
  #allocation0 [shape = 'u32[]', space=smem, size = 0x4, offset = 0x4, fixed_abs, tag = 'smem constant byte address 0x4 - core index']
  #allocation1 [shape = 'u32[144,128]{1,0:T(1,128)}', space=vmem, size = 0x12000, scoped, tag = 'internal scratch']
  #allocation2 [shape = 'f32[1,1]{1,0:T(1,128)S(6)}', space=smem, size = 0x200, scoped, tag = 'scoped memory for discriminator_forward.3']
  %s0 = inlined_call_operand.vmem [shape: f32[16,32], index: 0, kind: input, shape index: {}]
  %s1 = inlined_call_operand.vmem [shape: f32[32,128], index: 1, kind: input, shape index: {}]
  %s2 = inlined_call_operand.vmem [shape: f32[1,128], index: 2, kind: input, shape index: {}]
  %s3 = inlined_call_operand.vmem [shape: f32[8,128], index: 3, kind: input, shape index: {}]
  %s4 = inlined_call_operand.<no memory space> [shape: f32[1,1], index: 4, kind: input, shape index: {}]
  %s5 = inlined_call_operand.vmem [shape: f32[1,1,16], index: 5, kind: output, shape index: {}]
  %s6 = sld [smem:[#allocation0]]
  $region30: #{discriminator_forward.3} parent=0
    _
  %s8 = ssub.s32 1, %s6
  %s9 = scalar_select 0, %s8, %s6
  %10 = sst [smem:[#allocation2]] %s4
  // Predicated region
  $region2: #{discriminator_forward.3} parent=0 // pred_check
    _
  $region3: #{discriminator_forward.3} parent=0 // pred_check_branch
    %12 = sbr.rel (0) target = $region5
  $region4: #{discriminator_forward.3} parent=0 // pred_region
    _
  $region5: #{discriminator_forward.3} parent=0 // pred_fallthru
    _
  // Predicated region
  $region6: #{discriminator_forward.3} parent=0 // pred_check
    _
  $region7: #{discriminator_forward.3} parent=0 // pred_check_branch
    %14 = sbr.rel (0) target = $region9
  $region8: #{discriminator_forward.3} parent=0 // pred_region
    _
  $region9: #{discriminator_forward.3} parent=0 // pred_fallthru
    _
  // Predicated region
  $region10: #{discriminator_forward.3} parent=0 // pred_check
    _
  $region11: #{discriminator_forward.3} parent=0 // pred_check_branch
    %16 = sbr.rel (0) target = $region13
  $region12: #{discriminator_forward.3} parent=0 // pred_region
    _
  $region13: #{discriminator_forward.3} parent=0 // pred_fallthru
    _
  // Predicated region
  $region14: #{discriminator_forward.3} parent=0 // pred_check
    _
  $region15: #{discriminator_forward.3} parent=0 // pred_check_branch
    %18 = sbr.rel (0) target = $region17
  $region16: #{discriminator_forward.3} parent=0 // pred_region
    _
  $region17: #{discriminator_forward.3} parent=0 // pred_fallthru
    _
  // Predicated region
  $region18: #{discriminator_forward.3} parent=0 // pred_check
    _
  $region19: #{discriminator_forward.3} parent=0 // pred_check_branch
    %20 = sbr.rel (0) target = $region21
  $region20: #{discriminator_forward.3} parent=0 // pred_region
    _
  $region21: #{discriminator_forward.3} parent=0 // pred_fallthru
    _
  %v21 = vld [vmem:[%s0] sm:$0xff]
  %v22 = vld [vmem:[%s0 + $0x8] sm:$0xff]
  %v23 = vld [vmem:[%s1] sm:$0xff]
  %v24 = vld [vmem:[%s1 + $0x8] sm:$0xff]
  %v25 = vld [vmem:[%s1 + $0x10] sm:$0xff]
  %v26 = vld [vmem:[%s1 + $0x18] sm:$0xff]
  %v27 = vld [vmem:[%s2] sm:$0x1]
  %v29 = vlaneseq
  %v30 = vshrl.u32 %v29, 7
  %v31 = vsub.s32 0, %v30
  %v32 = vrot.slane %v27, %v31
  %vm34 = vcmask 261120
  %v36 = vsel %vm34, %v21, 0
  %v39 = vsel %vm34, %v22, 0
  %41 = vmatprep.subr.mxu0 0.0
  %42 = vmatpush1.msra.mxu0 %v23
  %43 = vmatprep.subr.mxu0 0.0
  %44 = vmatpush1.msra.mxu0 %v24
  %45 = vmatprep.subr.mxu0 0.0
  %46 = vmatpush1.msra.mxu0 %v25
  %47 = vmatprep.subr.mxu0 0.0
  %48 = vmatpush1.msra.mxu0 %v26
  %49 = vmatprep.subr.mxu0 0.0
  %50 = vmatpush1.msra.mxu0 0.0
  %51 = vmatprep.subr.mxu0 0.0
  %52 = vmatpush1.msra.mxu0 0.0
  %53 = vmatprep.subr.mxu0 0.0
  %54 = vmatpush1.msra.mxu0 0.0
  %55 = vmatprep.subr.mxu0 0.0
  %56 = vmatpush1.msra.mxu0 0.0
  %57 = vmatprep.subr.mxu0 0.0
  %58 = vmatpush1.msra.mxu0 0.0
  %59 = vmatprep.subr.mxu0 0.0
  %60 = vmatpush1.msra.mxu0 0.0
  %61 = vmatprep.subr.mxu0 0.0
  %62 = vmatpush1.msra.mxu0 0.0
  %63 = vmatprep.subr.mxu0 0.0
  %64 = vmatpush1.msra.mxu0 0.0
  %65 = vmatprep.subr.mxu0 0.0
  %66 = vmatpush1.msra.mxu0 0.0
  %67 = vmatprep.subr.mxu0 0.0
  %68 = vmatpush1.msra.mxu0 0.0
  %69 = vmatprep.subr.mxu0 0.0
  %70 = vmatpush1.msra.mxu0 0.0
  %71 = vmatprep.subr.mxu0 0.0
  %72 = vmatpush1.msra.mxu0 0.0
  %73 = vmatprep.subr.mxu0 0.0
  %74 = vmatpush1.msra.mxu0 0.0
  %75 = vmatprep.subr.mxu0 0.0
  %76 = vmatpush1.msra.mxu0 0.0
  %77 = vmatprep.subr.mxu0 0.0
  %78 = vmatpush1.msra.mxu0 0.0
  %79 = vmatprep.subr.mxu0 0.0
  %80 = vmatpush1.msra.mxu0 0.0
  %81 = vmatprep.subr.mxu0 0.0
  %82 = vmatpush1.msra.mxu0 0.0
  %83 = vmatprep.subr.mxu0 0.0
  %84 = vmatpush1.msra.mxu0 0.0
  %85 = vmatprep.subr.mxu0 0.0
  %86 = vmatpush1.msra.mxu0 0.0
  %87 = vmatprep.subr.mxu0 0.0
  %88 = vmatpush1.msra.mxu0 0.0
  %89 = vmatprep.subr.mxu0 0.0
  %90 = vmatpush1.msra.mxu0 0.0
  %91 = vmatprep.subr.mxu0 0.0
  %92 = vmatpush1.msra.mxu0 0.0
  %93 = vmatprep.subr.mxu0 0.0
  %94 = vmatpush1.msra.mxu0 0.0
  %95 = vmatprep.subr.mxu0 0.0
  %96 = vmatpush1.msra.mxu0 0.0
  %97 = vmatprep.subr.mxu0 0.0
  %98 = vmatpush1.msra.mxu0 0.0
  %99 = vmatprep.subr.mxu0 0.0
  %100 = vmatpush1.msra.mxu0 0.0
  %101 = vmatprep.subr.mxu0 0.0
  %102 = vmatpush1.msra.mxu0 0.0
  %103 = vmatprep.subr.mxu0 0.0
  %104 = vmatpush1.msra.mxu0 0.0
  %105 = vmatprep.mubr.f32.mxu0 0.0
  %106 = vmatmul.mubr.f32.gmra.mrb[0].mxu0 %v36
  %v107 = vpop.f32.mrb[0].mxu0
  %v108 = vadd.f32 %v32, %v107
  %v109 = vpop.f32.mrb[0].mxu0
  %110 = vmatprep.mubr.f32.mxu0 0.0
  %111 = vmatmul.mubr.f32.gmra.mrb[0].mxu0 %v39
  %v112 = vpop.f32.mrb[0].mxu0
  %v113 = vadd.f32 %v32, %v112
  %v114 = vpop.f32.mrb[0].mxu0
  %115 = vdwg.mxu0
  %v116 = vmax.f32 %v108, 0.0
  %v117 = vmax.f32 %v113, 0.0
  %v118 = vld [vmem:[%s3] sm:$0xff]
  %119 = vmatprep.subr.mxu0 0.0
  %120 = vmatpush1.xpose.msra.mxu0 %v116
  %121 = vmatprep.subr.mxu0 0.0
  %122 = vmatpush1.xpose.msra.mxu0 %v117
  %123 = vmatprep.subr.mxu0 0.0
  %124 = vmatpush1.xpose.msra.mxu0 0.0
  %125 = vmatprep.subr.mxu0 0.0
  %126 = vmatpush1.xpose.msra.mxu0 0.0
  %127 = vmatprep.subr.mxu0 0.0
  %128 = vmatpush1.xpose.msra.mxu0 0.0
  %129 = vmatprep.subr.mxu0 0.0
  %130 = vmatpush1.xpose.msra.mxu0 0.0
  %131 = vmatprep.subr.mxu0 0.0
  %132 = vmatpush1.xpose.msra.mxu0 0.0
  %133 = vmatprep.subr.mxu0 0.0
  %134 = vmatpush1.xpose.msra.mxu0 0.0
  %135 = vmatprep.subr.mxu0 0.0
  %136 = vmatpush1.xpose.msra.mxu0 0.0
  %137 = vmatprep.subr.mxu0 0.0
  %138 = vmatpush1.xpose.msra.mxu0 0.0
  %139 = vmatprep.subr.mxu0 0.0
  %140 = vmatpush1.xpose.msra.mxu0 0.0
  %141 = vmatprep.subr.mxu0 0.0
  %142 = vmatpush1.xpose.msra.mxu0 0.0
  %143 = vmatprep.subr.mxu0 0.0
  %144 = vmatpush1.xpose.msra.mxu0 0.0
  %145 = vmatprep.subr.mxu0 0.0
  %146 = vmatpush1.xpose.msra.mxu0 0.0
  %147 = vmatprep.subr.mxu0 0.0
  %148 = vmatpush1.xpose.msra.mxu0 0.0
  %149 = vmatprep.subr.mxu0 0.0
  %150 = vmatpush1.xpose.msra.mxu0 0.0
  %151 = vmatprep.subr.mxu0 0.0
  %152 = vmatpush1.xpose.msra.mxu0 0.0
  %153 = vmatprep.subr.mxu0 0.0
  %154 = vmatpush1.xpose.msra.mxu0 0.0
  %155 = vmatprep.subr.mxu0 0.0
  %156 = vmatpush1.xpose.msra.mxu0 0.0
  %157 = vmatprep.subr.mxu0 0.0
  %158 = vmatpush1.xpose.msra.mxu0 0.0
  %159 = vmatprep.subr.mxu0 0.0
  %160 = vmatpush1.xpose.msra.mxu0 0.0
  %161 = vmatprep.subr.mxu0 0.0
  %162 = vmatpush1.xpose.msra.mxu0 0.0
  %163 = vmatprep.subr.mxu0 0.0
  %164 = vmatpush1.xpose.msra.mxu0 0.0
  %165 = vmatprep.subr.mxu0 0.0
  %166 = vmatpush1.xpose.msra.mxu0 0.0
  %167 = vmatprep.subr.mxu0 0.0
  %168 = vmatpush1.xpose.msra.mxu0 0.0
  %169 = vmatprep.subr.mxu0 0.0
  %170 = vmatpush1.xpose.msra.mxu0 0.0
  %171 = vmatprep.subr.mxu0 0.0
  %172 = vmatpush1.xpose.msra.mxu0 0.0
  %173 = vmatprep.subr.mxu0 0.0
  %174 = vmatpush1.xpose.msra.mxu0 0.0
  %175 = vmatprep.subr.mxu0 0.0
  %176 = vmatpush1.xpose.msra.mxu0 0.0
  %177 = vmatprep.subr.mxu0 0.0
  %178 = vmatpush1.xpose.msra.mxu0 0.0
  %179 = vmatprep.subr.mxu0 0.0
  %180 = vmatpush1.xpose.msra.mxu0 0.0
  %181 = vmatprep.subr.mxu0 0.0
  %182 = vmatpush1.xpose.msra.mxu0 0.0
  %183 = vmatprep.mubr.f32.mxu0 0.0
  %184 = vmatmul.mubr.f32.gmra.mrb[0].mxu0 %v118
  %v185 = vpop.f32.mrb[0].mxu0
  %v186 = vadd.f32 0.0, %v185
  %v187 = vpop.f32.mrb[0].mxu0
  %188 = vdwg.mxu0
  %s189 = sld [smem:[#allocation2]]
  %v190 = vstv %s189
  %v191 = vadd.f32 %v186, %v190
  %v192 = vxor.u32 %v191, 2147483648
  %v193 = vmul.f32 %v192, 1.442695
  %v194 = vpow.pop %v193
  %v195 = vadd.f32 %v194, 1.0
  %v196 = vrcp.pop %v195
  %v197 = vmul.f32 1.0, %v196
  %vm198 = vcmask 122880
  %199 = vst.msk [vmem:[%s5] sm:$0x1] %vm198, %v197
  // Predicated region
  $region22: #{discriminator_forward.3} parent=0 // pred_check
    _
  $region23: #{discriminator_forward.3} parent=0 // pred_check_branch
    %201 = sbr.rel (0) target = $region25
  $region24: #{discriminator_forward.3} parent=0 // pred_region
    _
  $region25: #{discriminator_forward.3} parent=0 // pred_fallthru
    _
  // Predicated region
  $region26: #{discriminator_forward.3} parent=0 // pred_check
    _
  $region27: #{discriminator_forward.3} parent=0 // pred_check_branch
    %203 = sbr.rel (0) target = $region29
  $region28: #{discriminator_forward.3} parent=0 // pred_region
    _
  $region29: #{discriminator_forward.3} parent=0 // pred_fallthru
    _

</llo_original>
